<compile_context>
chip_gen: v7x
topology: tpu7x:2x2x1
jax: 0.10.0
libtpu: 0.0.40
codegen_flags: <defaults>
</compile_context>

<pallas_src>
from math import ceil, floor

import numpy as np
import jax
import jax.numpy as jnp
from jax.experimental import pallas as pl
from jax.experimental.pallas import tpu as pltpu


# --------------------------------------------------------------------------
# Level geometry (exactly as the PyTorch code computes it)
# --------------------------------------------------------------------------
def _level_params(W, num_level):
    """Per level: (kernel_w, [(lo, hi) clamped window per output column])."""
    params = []
    for i in range(num_level):
        level = i + 1
        kw = ceil(W / level)
        pad = floor((kw * level - W + 1) / 2)
        ow = (W + 2 * pad - kw) // kw + 1  # floor formula, ceil_mode=False
        wins = []
        for j in range(ow):
            start = j * kw - pad
            lo, hi = max(start, 0), min(start + kw, W)
            # Guard against degenerate configs (empty window => trace error).
            assert 0 <= lo < hi <= W, (
                f"degenerate pooling window at level {level}: "
                f"kernel={kw}, pad={pad}, W={W}")
            wins.append((lo, hi))
        params.append((kw, wins))
    return params


def _round_up(x, m):
    return ((x + m - 1) // m) * m


def _build_pool_matrix(W, params, g, total_ow):
    """Block-diagonal (g*W, g*total_ow) avg-pool matrix, 1/kw weights."""
    P0 = np.zeros((W, total_ow), np.float32)
    col = 0
    for kw, wins in params:
        for lo, hi in wins:
            # count_include_pad=True: divide by full kernel width kw.
            P0[lo:hi, col] = 1.0 / kw
            col += 1
    P = np.zeros((g * W, g * total_ow), np.float32)
    for q in range(g):
        P[q * W:(q + 1) * W, q * total_ow:(q + 1) * total_ow] = P0
    return jnp.asarray(P)


# --------------------------------------------------------------------------
# Kernels
# --------------------------------------------------------------------------
def _avg_kernel(x_ref, p_ref, o_ref):
    # One MXU matmul produces every level/window/group column of this tile.
    o_ref[...] = jnp.dot(
        x_ref[...].astype(jnp.float32),
        p_ref[...],
        preferred_element_type=jnp.float32,
        precision=jax.lax.Precision.HIGHEST,
    ).astype(o_ref.dtype)


def _make_max_kernel(W, g, params):
    def kernel(x_ref, o_ref):
        x = x_ref[...]                      # (TM, g*W), lane-dense packed tile
        cols = []
        for q in range(g):                  # g packed row-groups per row
            base = q * W
            for kw, wins in params:
                for lo, hi in wins:
                    # torch max_pool2d pads with -inf -> clamping the window
                    # to valid columns is equivalent.
                    cols.append(jnp.max(x[:, base + lo:base + hi],
                                        axis=1, keepdims=True))
        # Single stacked write of the combined (TM, g*total_ow) result.
        o_ref[...] = cols[0] if len(cols) == 1 else jnp.concatenate(cols, axis=1)
    return kernel


# --------------------------------------------------------------------------
# Wrapper
# --------------------------------------------------------------------------
def spatial_pyramid_pooling_2d(x, num_level, pool_type='max_pool',
                               tm_target=2048):
    N, C, H, W = x.shape
    M = N * C * H
    params = _level_params(W, num_level)
    ows = [len(wins) for _, wins in params]
    total_ow = sum(ows)

    # --- lane packing: g consecutive rows share one 128-lane vreg row -------
    g = max(1, 128 // W)
    gW = g * W
    g_ow = g * total_ow

    # --- tiling of the packed-row axis --------------------------------------
    Mp_raw = pl.cdiv(M, g)
    TM0 = min(tm_target, _round_up(Mp_raw, 8))
    grid = pl.cdiv(Mp_raw, TM0)
    TM = _round_up(pl.cdiv(Mp_raw, grid), 8)     # multiple of 8 (f32 sublanes)
    Mp = grid * TM

    rows_padded = Mp * g
    x2d = x.reshape(M, W)
    if rows_padded != M:
        x2d = jnp.pad(x2d, ((0, rows_padded - M), (0, 0)))
    xp = x2d.reshape(Mp, gW)                     # free, contiguous reshape

    out_shape = jax.ShapeDtypeStruct((Mp, g_ow), x.dtype)
    in_spec_x = pl.BlockSpec((TM, gW), lambda i: (i, 0))
    out_spec = pl.BlockSpec((TM, g_ow), lambda i: (i, 0))

    # ~1 MiB input + ~1 MiB (lane-padded) output per buffer, x2 double
    # buffering ~= 4-5 MiB -> comfortably inside scoped VMEM on v5e/v6e/v7x.
    compiler_params = pltpu.CompilerParams(
        dimension_semantics=("parallel",),       # megacore shard on v7x
        vmem_limit_bytes=32 * 1024 * 1024,
    )

    if pool_type == 'avg_pool':
        P = _build_pool_matrix(W, params, g, total_ow)
        pooled = pl.pallas_call(
            _avg_kernel,
            out_shape=out_shape,
            grid=(grid,),
            in_specs=[in_spec_x,
                      pl.BlockSpec((gW, g_ow), lambda i: (0, 0))],
            out_specs=out_spec,
            compiler_params=compiler_params,
        )(xp, P)
    else:
        pooled = pl.pallas_call(
            _make_max_kernel(W, g, params),
            out_shape=out_shape,
            grid=(grid,),
            in_specs=[in_spec_x],
            out_specs=out_spec,
            compiler_params=compiler_params,
        )(xp)

    # Unpack groups, drop row padding, split per level, and concatenate in the
    # same order as torch: cat_l( pooled_l.view(N, -1) ) along dim 1.
    flat = pooled.reshape(Mp * g, total_ow)[:M]          # (M, sum(ow))
    pieces, off = [], 0
    for ow in ows:
        pieces.append(flat[:, off:off + ow].reshape(N, C * H * ow))
        off += ow
    return jnp.concatenate(pieces, axis=1)


# --------------------------------------------------------------------------
# Pure-JAX reference mirroring F.{max,avg}_pool2d semantics
# --------------------------------------------------------------------------
def _reference(x, num_level, pool_type):
    N, C, H, W = x.shape
    outs = []
    for i in range(num_level):
        level = i + 1
        kw = ceil(W / level)
        pad = floor((kw * level - W + 1) / 2)
        ow = (W + 2 * pad - kw) // kw + 1
        pad_val = -jnp.inf if pool_type == 'max_pool' else 0.0
        xp = jnp.pad(x, ((0, 0), (0, 0), (0, 0), (pad, pad)),
                     constant_values=pad_val)
        xp = xp[..., : ow * kw].reshape(N, C, H, ow, kw)
        if pool_type == 'max_pool':
            t = jnp.max(xp, axis=-1)
        else:
            t = jnp.sum(xp, axis=-1) / kw
        outs.append(t.reshape(N, -1))
    return jnp.concatenate(outs, axis=1)


if __name__ == "__main__":
    key = jax.random.PRNGKey(0)
    x = jax.random.normal(key, (2, 4, 16, 16), dtype=jnp.float32)
    num_level = 3

    expected_cols = 4 * 16 * sum(range(1, num_level + 1))  # C * H * (1+2+3)

    for pool_type in ('max_pool', 'avg_pool'):
        out = spatial_pyramid_pooling_2d(x, num_level, pool_type)
        out = jax.block_until_ready(out)
        assert out.shape == (2, expected_cols), out.shape
        ref = _reference(x, num_level, pool_type)
        assert jnp.allclose(out, ref, atol=1e-5, rtol=1e-5), (
            f"mismatch for {pool_type}"
        )

    print("KERNEL_OK")
</pallas_src>

<mosaic_0001>
module attributes {stable_mosaic.version = 11 : i64} {
  func.func @kernel(%arg0: i32, %arg1: memref<16x128xf32, #tpu.memory_space<vmem>>, %arg2: memref<16x48xf32, #tpu.memory_space<vmem>>) attributes {dimension_semantics = [#tpu.dimension_semantics<parallel>], iteration_bounds = array<i64: 1>, scalar_prefetch = 0 : i64, scratch_operands = 0 : i64, tpu.core_type = #tpu.core_type<tc>, window_params = [{transform_indices = @transform_0, window_bounds = array<i64: 16, 128>}, {transform_indices = @transform_1, window_bounds = array<i64: 16, 48>}]} {
    %c0 = arith.constant 0 : index
    %c0_0 = arith.constant 0 : index
    %0 = vector.load %arg1[%c0, %c0_0] : memref<16x128xf32, #tpu.memory_space<vmem>>, vector<16x128xf32>
    %1 = vector.extract_strided_slice %0 {offsets = [0, 0], sizes = [16, 16], strides = [1, 1]} : vector<16x128xf32> to vector<16x16xf32>
    %cst = arith.constant dense<0xFF800000> : vector<16xf32>
    %2 = vector.multi_reduction <maximumf>, %1, %cst [1] : vector<16x16xf32> to vector<16xf32>
    %3 = vector.shape_cast %2 : vector<16xf32> to vector<16x1xf32>
    %4 = vector.extract_strided_slice %0 {offsets = [0, 0], sizes = [16, 8], strides = [1, 1]} : vector<16x128xf32> to vector<16x8xf32>
    %cst_1 = arith.constant dense<0xFF800000> : vector<16xf32>
    %5 = vector.multi_reduction <maximumf>, %4, %cst_1 [1] : vector<16x8xf32> to vector<16xf32>
    %6 = vector.shape_cast %5 : vector<16xf32> to vector<16x1xf32>
    %7 = vector.extract_strided_slice %0 {offsets = [0, 8], sizes = [16, 8], strides = [1, 1]} : vector<16x128xf32> to vector<16x8xf32>
    %cst_2 = arith.constant dense<0xFF800000> : vector<16xf32>
    %8 = vector.multi_reduction <maximumf>, %7, %cst_2 [1] : vector<16x8xf32> to vector<16xf32>
    %9 = vector.shape_cast %8 : vector<16xf32> to vector<16x1xf32>
    %10 = vector.extract_strided_slice %0 {offsets = [0, 0], sizes = [16, 5], strides = [1, 1]} : vector<16x128xf32> to vector<16x5xf32>
    %cst_3 = arith.constant dense<0xFF800000> : vector<16xf32>
    %11 = vector.multi_reduction <maximumf>, %10, %cst_3 [1] : vector<16x5xf32> to vector<16xf32>
    %12 = vector.shape_cast %11 : vector<16xf32> to vector<16x1xf32>
    %13 = vector.extract_strided_slice %0 {offsets = [0, 5], sizes = [16, 6], strides = [1, 1]} : vector<16x128xf32> to vector<16x6xf32>
    %cst_4 = arith.constant dense<0xFF800000> : vector<16xf32>
    %14 = vector.multi_reduction <maximumf>, %13, %cst_4 [1] : vector<16x6xf32> to vector<16xf32>
    %15 = vector.shape_cast %14 : vector<16xf32> to vector<16x1xf32>
    %16 = vector.extract_strided_slice %0 {offsets = [0, 11], sizes = [16, 5], strides = [1, 1]} : vector<16x128xf32> to vector<16x5xf32>
    %cst_5 = arith.constant dense<0xFF800000> : vector<16xf32>
    %17 = vector.multi_reduction <maximumf>, %16, %cst_5 [1] : vector<16x5xf32> to vector<16xf32>
    %18 = vector.shape_cast %17 : vector<16xf32> to vector<16x1xf32>
    %19 = vector.extract_strided_slice %0 {offsets = [0, 16], sizes = [16, 16], strides = [1, 1]} : vector<16x128xf32> to vector<16x16xf32>
    %cst_6 = arith.constant dense<0xFF800000> : vector<16xf32>
    %20 = vector.multi_reduction <maximumf>, %19, %cst_6 [1] : vector<16x16xf32> to vector<16xf32>
    %21 = vector.shape_cast %20 : vector<16xf32> to vector<16x1xf32>
    %22 = vector.extract_strided_slice %0 {offsets = [0, 16], sizes = [16, 8], strides = [1, 1]} : vector<16x128xf32> to vector<16x8xf32>
    %cst_7 = arith.constant dense<0xFF800000> : vector<16xf32>
    %23 = vector.multi_reduction <maximumf>, %22, %cst_7 [1] : vector<16x8xf32> to vector<16xf32>
    %24 = vector.shape_cast %23 : vector<16xf32> to vector<16x1xf32>
    %25 = vector.extract_strided_slice %0 {offsets = [0, 24], sizes = [16, 8], strides = [1, 1]} : vector<16x128xf32> to vector<16x8xf32>
    %cst_8 = arith.constant dense<0xFF800000> : vector<16xf32>
    %26 = vector.multi_reduction <maximumf>, %25, %cst_8 [1] : vector<16x8xf32> to vector<16xf32>
    %27 = vector.shape_cast %26 : vector<16xf32> to vector<16x1xf32>
    %28 = vector.extract_strided_slice %0 {offsets = [0, 16], sizes = [16, 5], strides = [1, 1]} : vector<16x128xf32> to vector<16x5xf32>
    %cst_9 = arith.constant dense<0xFF800000> : vector<16xf32>
    %29 = vector.multi_reduction <maximumf>, %28, %cst_9 [1] : vector<16x5xf32> to vector<16xf32>
    %30 = vector.shape_cast %29 : vector<16xf32> to vector<16x1xf32>
    %31 = vector.extract_strided_slice %0 {offsets = [0, 21], sizes = [16, 6], strides = [1, 1]} : vector<16x128xf32> to vector<16x6xf32>
    %cst_10 = arith.constant dense<0xFF800000> : vector<16xf32>
    %32 = vector.multi_reduction <maximumf>, %31, %cst_10 [1] : vector<16x6xf32> to vector<16xf32>
    %33 = vector.shape_cast %32 : vector<16xf32> to vector<16x1xf32>
    %34 = vector.extract_strided_slice %0 {offsets = [0, 27], sizes = [16, 5], strides = [1, 1]} : vector<16x128xf32> to vector<16x5xf32>
    %cst_11 = arith.constant dense<0xFF800000> : vector<16xf32>
    %35 = vector.multi_reduction <maximumf>, %34, %cst_11 [1] : vector<16x5xf32> to vector<16xf32>
    %36 = vector.shape_cast %35 : vector<16xf32> to vector<16x1xf32>
    %37 = vector.extract_strided_slice %0 {offsets = [0, 32], sizes = [16, 16], strides = [1, 1]} : vector<16x128xf32> to vector<16x16xf32>
    %cst_12 = arith.constant dense<0xFF800000> : vector<16xf32>
    %38 = vector.multi_reduction <maximumf>, %37, %cst_12 [1] : vector<16x16xf32> to vector<16xf32>
    %39 = vector.shape_cast %38 : vector<16xf32> to vector<16x1xf32>
    %40 = vector.extract_strided_slice %0 {offsets = [0, 32], sizes = [16, 8], strides = [1, 1]} : vector<16x128xf32> to vector<16x8xf32>
    %cst_13 = arith.constant dense<0xFF800000> : vector<16xf32>
    %41 = vector.multi_reduction <maximumf>, %40, %cst_13 [1] : vector<16x8xf32> to vector<16xf32>
    %42 = vector.shape_cast %41 : vector<16xf32> to vector<16x1xf32>
    %43 = vector.extract_strided_slice %0 {offsets = [0, 40], sizes = [16, 8], strides = [1, 1]} : vector<16x128xf32> to vector<16x8xf32>
    %cst_14 = arith.constant dense<0xFF800000> : vector<16xf32>
    %44 = vector.multi_reduction <maximumf>, %43, %cst_14 [1] : vector<16x8xf32> to vector<16xf32>
    %45 = vector.shape_cast %44 : vector<16xf32> to vector<16x1xf32>
    %46 = vector.extract_strided_slice %0 {offsets = [0, 32], sizes = [16, 5], strides = [1, 1]} : vector<16x128xf32> to vector<16x5xf32>
    %cst_15 = arith.constant dense<0xFF800000> : vector<16xf32>
    %47 = vector.multi_reduction <maximumf>, %46, %cst_15 [1] : vector<16x5xf32> to vector<16xf32>
    %48 = vector.shape_cast %47 : vector<16xf32> to vector<16x1xf32>
    %49 = vector.extract_strided_slice %0 {offsets = [0, 37], sizes = [16, 6], strides = [1, 1]} : vector<16x128xf32> to vector<16x6xf32>
    %cst_16 = arith.constant dense<0xFF800000> : vector<16xf32>
    %50 = vector.multi_reduction <maximumf>, %49, %cst_16 [1] : vector<16x6xf32> to vector<16xf32>
    %51 = vector.shape_cast %50 : vector<16xf32> to vector<16x1xf32>
    %52 = vector.extract_strided_slice %0 {offsets = [0, 43], sizes = [16, 5], strides = [1, 1]} : vector<16x128xf32> to vector<16x5xf32>
    %cst_17 = arith.constant dense<0xFF800000> : vector<16xf32>
    %53 = vector.multi_reduction <maximumf>, %52, %cst_17 [1] : vector<16x5xf32> to vector<16xf32>
    %54 = vector.shape_cast %53 : vector<16xf32> to vector<16x1xf32>
    %55 = vector.extract_strided_slice %0 {offsets = [0, 48], sizes = [16, 16], strides = [1, 1]} : vector<16x128xf32> to vector<16x16xf32>
    %cst_18 = arith.constant dense<0xFF800000> : vector<16xf32>
    %56 = vector.multi_reduction <maximumf>, %55, %cst_18 [1] : vector<16x16xf32> to vector<16xf32>
    %57 = vector.shape_cast %56 : vector<16xf32> to vector<16x1xf32>
    %58 = vector.extract_strided_slice %0 {offsets = [0, 48], sizes = [16, 8], strides = [1, 1]} : vector<16x128xf32> to vector<16x8xf32>
    %cst_19 = arith.constant dense<0xFF800000> : vector<16xf32>
    %59 = vector.multi_reduction <maximumf>, %58, %cst_19 [1] : vector<16x8xf32> to vector<16xf32>
    %60 = vector.shape_cast %59 : vector<16xf32> to vector<16x1xf32>
    %61 = vector.extract_strided_slice %0 {offsets = [0, 56], sizes = [16, 8], strides = [1, 1]} : vector<16x128xf32> to vector<16x8xf32>
    %cst_20 = arith.constant dense<0xFF800000> : vector<16xf32>
    %62 = vector.multi_reduction <maximumf>, %61, %cst_20 [1] : vector<16x8xf32> to vector<16xf32>
    %63 = vector.shape_cast %62 : vector<16xf32> to vector<16x1xf32>
    %64 = vector.extract_strided_slice %0 {offsets = [0, 48], sizes = [16, 5], strides = [1, 1]} : vector<16x128xf32> to vector<16x5xf32>
    %cst_21 = arith.constant dense<0xFF800000> : vector<16xf32>
    %65 = vector.multi_reduction <maximumf>, %64, %cst_21 [1] : vector<16x5xf32> to vector<16xf32>
    %66 = vector.shape_cast %65 : vector<16xf32> to vector<16x1xf32>
    %67 = vector.extract_strided_slice %0 {offsets = [0, 53], sizes = [16, 6], strides = [1, 1]} : vector<16x128xf32> to vector<16x6xf32>
    %cst_22 = arith.constant dense<0xFF800000> : vector<16xf32>
    %68 = vector.multi_reduction <maximumf>, %67, %cst_22 [1] : vector<16x6xf32> to vector<16xf32>
    %69 = vector.shape_cast %68 : vector<16xf32> to vector<16x1xf32>
    %70 = vector.extract_strided_slice %0 {offsets = [0, 59], sizes = [16, 5], strides = [1, 1]} : vector<16x128xf32> to vector<16x5xf32>
    %cst_23 = arith.constant dense<0xFF800000> : vector<16xf32>
    %71 = vector.multi_reduction <maximumf>, %70, %cst_23 [1] : vector<16x5xf32> to vector<16xf32>
    %72 = vector.shape_cast %71 : vector<16xf32> to vector<16x1xf32>
    %73 = vector.extract_strided_slice %0 {offsets = [0, 64], sizes = [16, 16], strides = [1, 1]} : vector<16x128xf32> to vector<16x16xf32>
    %cst_24 = arith.constant dense<0xFF800000> : vector<16xf32>
    %74 = vector.multi_reduction <maximumf>, %73, %cst_24 [1] : vector<16x16xf32> to vector<16xf32>
    %75 = vector.shape_cast %74 : vector<16xf32> to vector<16x1xf32>
    %76 = vector.extract_strided_slice %0 {offsets = [0, 64], sizes = [16, 8], strides = [1, 1]} : vector<16x128xf32> to vector<16x8xf32>
    %cst_25 = arith.constant dense<0xFF800000> : vector<16xf32>
    %77 = vector.multi_reduction <maximumf>, %76, %cst_25 [1] : vector<16x8xf32> to vector<16xf32>
    %78 = vector.shape_cast %77 : vector<16xf32> to vector<16x1xf32>
    %79 = vector.extract_strided_slice %0 {offsets = [0, 72], sizes = [16, 8], strides = [1, 1]} : vector<16x128xf32> to vector<16x8xf32>
    %cst_26 = arith.constant dense<0xFF800000> : vector<16xf32>
    %80 = vector.multi_reduction <maximumf>, %79, %cst_26 [1] : vector<16x8xf32> to vector<16xf32>
    %81 = vector.shape_cast %80 : vector<16xf32> to vector<16x1xf32>
    %82 = vector.extract_strided_slice %0 {offsets = [0, 64], sizes = [16, 5], strides = [1, 1]} : vector<16x128xf32> to vector<16x5xf32>
    %cst_27 = arith.constant dense<0xFF800000> : vector<16xf32>
    %83 = vector.multi_reduction <maximumf>, %82, %cst_27 [1] : vector<16x5xf32> to vector<16xf32>
    %84 = vector.shape_cast %83 : vector<16xf32> to vector<16x1xf32>
    %85 = vector.extract_strided_slice %0 {offsets = [0, 69], sizes = [16, 6], strides = [1, 1]} : vector<16x128xf32> to vector<16x6xf32>
    %cst_28 = arith.constant dense<0xFF800000> : vector<16xf32>
    %86 = vector.multi_reduction <maximumf>, %85, %cst_28 [1] : vector<16x6xf32> to vector<16xf32>
    %87 = vector.shape_cast %86 : vector<16xf32> to vector<16x1xf32>
    %88 = vector.extract_strided_slice %0 {offsets = [0, 75], sizes = [16, 5], strides = [1, 1]} : vector<16x128xf32> to vector<16x5xf32>
    %cst_29 = arith.constant dense<0xFF800000> : vector<16xf32>
    %89 = vector.multi_reduction <maximumf>, %88, %cst_29 [1] : vector<16x5xf32> to vector<16xf32>
    %90 = vector.shape_cast %89 : vector<16xf32> to vector<16x1xf32>
    %91 = vector.extract_strided_slice %0 {offsets = [0, 80], sizes = [16, 16], strides = [1, 1]} : vector<16x128xf32> to vector<16x16xf32>
    %cst_30 = arith.constant dense<0xFF800000> : vector<16xf32>
    %92 = vector.multi_reduction <maximumf>, %91, %cst_30 [1] : vector<16x16xf32> to vector<16xf32>
    %93 = vector.shape_cast %92 : vector<16xf32> to vector<16x1xf32>
    %94 = vector.extract_strided_slice %0 {offsets = [0, 80], sizes = [16, 8], strides = [1, 1]} : vector<16x128xf32> to vector<16x8xf32>
    %cst_31 = arith.constant dense<0xFF800000> : vector<16xf32>
    %95 = vector.multi_reduction <maximumf>, %94, %cst_31 [1] : vector<16x8xf32> to vector<16xf32>
    %96 = vector.shape_cast %95 : vector<16xf32> to vector<16x1xf32>
    %97 = vector.extract_strided_slice %0 {offsets = [0, 88], sizes = [16, 8], strides = [1, 1]} : vector<16x128xf32> to vector<16x8xf32>
    %cst_32 = arith.constant dense<0xFF800000> : vector<16xf32>
    %98 = vector.multi_reduction <maximumf>, %97, %cst_32 [1] : vector<16x8xf32> to vector<16xf32>
    %99 = vector.shape_cast %98 : vector<16xf32> to vector<16x1xf32>
    %100 = vector.extract_strided_slice %0 {offsets = [0, 80], sizes = [16, 5], strides = [1, 1]} : vector<16x128xf32> to vector<16x5xf32>
    %cst_33 = arith.constant dense<0xFF800000> : vector<16xf32>
    %101 = vector.multi_reduction <maximumf>, %100, %cst_33 [1] : vector<16x5xf32> to vector<16xf32>
    %102 = vector.shape_cast %101 : vector<16xf32> to vector<16x1xf32>
    %103 = vector.extract_strided_slice %0 {offsets = [0, 85], sizes = [16, 6], strides = [1, 1]} : vector<16x128xf32> to vector<16x6xf32>
    %cst_34 = arith.constant dense<0xFF800000> : vector<16xf32>
    %104 = vector.multi_reduction <maximumf>, %103, %cst_34 [1] : vector<16x6xf32> to vector<16xf32>
    %105 = vector.shape_cast %104 : vector<16xf32> to vector<16x1xf32>
    %106 = vector.extract_strided_slice %0 {offsets = [0, 91], sizes = [16, 5], strides = [1, 1]} : vector<16x128xf32> to vector<16x5xf32>
    %cst_35 = arith.constant dense<0xFF800000> : vector<16xf32>
    %107 = vector.multi_reduction <maximumf>, %106, %cst_35 [1] : vector<16x5xf32> to vector<16xf32>
    %108 = vector.shape_cast %107 : vector<16xf32> to vector<16x1xf32>
    %109 = vector.extract_strided_slice %0 {offsets = [0, 96], sizes = [16, 16], strides = [1, 1]} : vector<16x128xf32> to vector<16x16xf32>
    %cst_36 = arith.constant dense<0xFF800000> : vector<16xf32>
    %110 = vector.multi_reduction <maximumf>, %109, %cst_36 [1] : vector<16x16xf32> to vector<16xf32>
    %111 = vector.shape_cast %110 : vector<16xf32> to vector<16x1xf32>
    %112 = vector.extract_strided_slice %0 {offsets = [0, 96], sizes = [16, 8], strides = [1, 1]} : vector<16x128xf32> to vector<16x8xf32>
    %cst_37 = arith.constant dense<0xFF800000> : vector<16xf32>
    %113 = vector.multi_reduction <maximumf>, %112, %cst_37 [1] : vector<16x8xf32> to vector<16xf32>
    %114 = vector.shape_cast %113 : vector<16xf32> to vector<16x1xf32>
    %115 = vector.extract_strided_slice %0 {offsets = [0, 104], sizes = [16, 8], strides = [1, 1]} : vector<16x128xf32> to vector<16x8xf32>
    %cst_38 = arith.constant dense<0xFF800000> : vector<16xf32>
    %116 = vector.multi_reduction <maximumf>, %115, %cst_38 [1] : vector<16x8xf32> to vector<16xf32>
    %117 = vector.shape_cast %116 : vector<16xf32> to vector<16x1xf32>
    %118 = vector.extract_strided_slice %0 {offsets = [0, 96], sizes = [16, 5], strides = [1, 1]} : vector<16x128xf32> to vector<16x5xf32>
    %cst_39 = arith.constant dense<0xFF800000> : vector<16xf32>
    %119 = vector.multi_reduction <maximumf>, %118, %cst_39 [1] : vector<16x5xf32> to vector<16xf32>
    %120 = vector.shape_cast %119 : vector<16xf32> to vector<16x1xf32>
    %121 = vector.extract_strided_slice %0 {offsets = [0, 101], sizes = [16, 6], strides = [1, 1]} : vector<16x128xf32> to vector<16x6xf32>
    %cst_40 = arith.constant dense<0xFF800000> : vector<16xf32>
    %122 = vector.multi_reduction <maximumf>, %121, %cst_40 [1] : vector<16x6xf32> to vector<16xf32>
    %123 = vector.shape_cast %122 : vector<16xf32> to vector<16x1xf32>
    %124 = vector.extract_strided_slice %0 {offsets = [0, 107], sizes = [16, 5], strides = [1, 1]} : vector<16x128xf32> to vector<16x5xf32>
    %cst_41 = arith.constant dense<0xFF800000> : vector<16xf32>
    %125 = vector.multi_reduction <maximumf>, %124, %cst_41 [1] : vector<16x5xf32> to vector<16xf32>
    %126 = vector.shape_cast %125 : vector<16xf32> to vector<16x1xf32>
    %127 = vector.extract_strided_slice %0 {offsets = [0, 112], sizes = [16, 16], strides = [1, 1]} : vector<16x128xf32> to vector<16x16xf32>
    %cst_42 = arith.constant dense<0xFF800000> : vector<16xf32>
    %128 = vector.multi_reduction <maximumf>, %127, %cst_42 [1] : vector<16x16xf32> to vector<16xf32>
    %129 = vector.shape_cast %128 : vector<16xf32> to vector<16x1xf32>
    %130 = vector.extract_strided_slice %0 {offsets = [0, 112], sizes = [16, 8], strides = [1, 1]} : vector<16x128xf32> to vector<16x8xf32>
    %cst_43 = arith.constant dense<0xFF800000> : vector<16xf32>
    %131 = vector.multi_reduction <maximumf>, %130, %cst_43 [1] : vector<16x8xf32> to vector<16xf32>
    %132 = vector.shape_cast %131 : vector<16xf32> to vector<16x1xf32>
    %133 = vector.extract_strided_slice %0 {offsets = [0, 120], sizes = [16, 8], strides = [1, 1]} : vector<16x128xf32> to vector<16x8xf32>
    %cst_44 = arith.constant dense<0xFF800000> : vector<16xf32>
    %134 = vector.multi_reduction <maximumf>, %133, %cst_44 [1] : vector<16x8xf32> to vector<16xf32>
    %135 = vector.shape_cast %134 : vector<16xf32> to vector<16x1xf32>
    %136 = vector.extract_strided_slice %0 {offsets = [0, 112], sizes = [16, 5], strides = [1, 1]} : vector<16x128xf32> to vector<16x5xf32>
    %cst_45 = arith.constant dense<0xFF800000> : vector<16xf32>
    %137 = vector.multi_reduction <maximumf>, %136, %cst_45 [1] : vector<16x5xf32> to vector<16xf32>
    %138 = vector.shape_cast %137 : vector<16xf32> to vector<16x1xf32>
    %139 = vector.extract_strided_slice %0 {offsets = [0, 117], sizes = [16, 6], strides = [1, 1]} : vector<16x128xf32> to vector<16x6xf32>
    %cst_46 = arith.constant dense<0xFF800000> : vector<16xf32>
    %140 = vector.multi_reduction <maximumf>, %139, %cst_46 [1] : vector<16x6xf32> to vector<16xf32>
    %141 = vector.shape_cast %140 : vector<16xf32> to vector<16x1xf32>
    %142 = vector.extract_strided_slice %0 {offsets = [0, 123], sizes = [16, 5], strides = [1, 1]} : vector<16x128xf32> to vector<16x5xf32>
    %cst_47 = arith.constant dense<0xFF800000> : vector<16xf32>
    %143 = vector.multi_reduction <maximumf>, %142, %cst_47 [1] : vector<16x5xf32> to vector<16xf32>
    %144 = vector.shape_cast %143 : vector<16xf32> to vector<16x1xf32>
    %145 = tpu.concatenate %3, %6, %9, %12, %15, %18, %21, %24, %27, %30, %33, %36, %39, %42, %45, %48 in 1 : vector<16x1xf32>, vector<16x1xf32>, vector<16x1xf32>, vector<16x1xf32>, vector<16x1xf32>, vector<16x1xf32>, vector<16x1xf32>, vector<16x1xf32>, vector<16x1xf32>, vector<16x1xf32>, vector<16x1xf32>, vector<16x1xf32>, vector<16x1xf32>, vector<16x1xf32>, vector<16x1xf32>, vector<16x1xf32> -> vector<16x16xf32>
    %146 = tpu.concatenate %51, %54, %57, %60, %63, %66, %69, %72, %75, %78, %81, %84, %87, %90, %93, %96 in 1 : vector<16x1xf32>, vector<16x1xf32>, vector<16x1xf32>, vector<16x1xf32>, vector<16x1xf32>, vector<16x1xf32>, vector<16x1xf32>, vector<16x1xf32>, vector<16x1xf32>, vector<16x1xf32>, vector<16x1xf32>, vector<16x1xf32>, vector<16x1xf32>, vector<16x1xf32>, vector<16x1xf32>, vector<16x1xf32> -> vector<16x16xf32>
    %147 = tpu.concatenate %99, %102, %105, %108, %111, %114, %117, %120, %123, %126, %129, %132, %135, %138, %141, %144 in 1 : vector<16x1xf32>, vector<16x1xf32>, vector<16x1xf32>, vector<16x1xf32>, vector<16x1xf32>, vector<16x1xf32>, vector<16x1xf32>, vector<16x1xf32>, vector<16x1xf32>, vector<16x1xf32>, vector<16x1xf32>, vector<16x1xf32>, vector<16x1xf32>, vector<16x1xf32>, vector<16x1xf32>, vector<16x1xf32> -> vector<16x16xf32>
    %148 = tpu.concatenate %145, %146, %147 in 1 : vector<16x16xf32>, vector<16x16xf32>, vector<16x16xf32> -> vector<16x48xf32>
    %c0_48 = arith.constant 0 : index
    %c0_49 = arith.constant 0 : index
    %149 = vector.load %arg2[%c0_48, %c0_49] : memref<16x48xf32, #tpu.memory_space<vmem>>, vector<16x48xf32>
    tpu.vector_store %arg2[%c0_48, %c0_49], %148 {strides = array<i32>} : memref<16x48xf32, #tpu.memory_space<vmem>>, vector<16x48xf32>,
    return
  }
  func.func @transform_0(%arg0: i32) -> (i32, i32) {
    %c0_i32 = arith.constant 0 : i32
    %c0_i32_0 = arith.constant 0 : i32
    return %arg0, %c0_i32 : i32, i32
  }
  func.func @transform_1(%arg0: i32) -> (i32, i32) {
    %c0_i32 = arith.constant 0 : i32
    %c0_i32_0 = arith.constant 0 : i32
    return %arg0, %c0_i32 : i32, i32
  }
}

</mosaic_0001>

<llo_original>
// kernel: tpu_custom_call.1
$region0: #{tpu_custom_call.1}
  #allocation0 [shape = 'u32[]', space=smem, size = 0x4, offset = 0x4, fixed_abs, tag = 'smem constant byte address 0x4 - core index']
  #allocation1 [shape = 'u32[144,128]{1,0:T(1,128)}', space=vmem, size = 0x12000, scoped, tag = 'internal scratch']
  %s0 = inlined_call_operand.hbm [shape: f32[16,128], index: 0, kind: input, shape index: {}]
  %s1 = inlined_call_operand.hbm [shape: f32[16,48], index: 1, kind: output, shape index: {}]
  %s2 = sld [smem:[#allocation0]]
  $region18: #{tpu_custom_call.1} parent=0
    _
  %s4 = ssub.s32 1, %s2
  %s5 = scalar_select 0, %s4, %s2
  $region1: #{tpu_custom_call.1} parent=0
    #allocation2 [shape = 'u8[8192]{0}', space=vmem, size = 0x2000, scoped, tag = 'input window, operand 0, single buffered']
    #allocation3 [shape = 's32[1]{0}', space=sflag, size = 0x4, scoped, tag = 'scoped memory for tpu_custom_call.1']
    #allocation4 [shape = 's32[1]{0}', space=sflag, size = 0x4, scoped, tag = 'scoped memory for tpu_custom_call.1']
    #allocation5 [shape = 'u8[8192]{0}', space=vmem, size = 0x2000, scoped, tag = 'output window, operand 0, single buffered']
    %6 = vsyncpa [#allocation3], 0
    %7 = vsyncpa [#allocation4], 0
    // Predicated region
    $region2: #{tpu_custom_call.1} parent=1 // pred_check
      _
    $region3: #{tpu_custom_call.1} parent=1 // pred_check_branch
      %9 = sbr.rel (0) target = $region5
    $region4: #{tpu_custom_call.1} parent=1 // pred_region
      %s11 = ssub.s32 256, 256
      %12 = vsyncadd [#allocation3], %s11
      %s13 = sshll.u32 [#allocation2], 4
      %s14 = int_to_ptr.vmem [resolvable:$true] %s13
      %19 = dma.hbm_to_vmem [thread:$0]  %s0, 256, %s14, [#allocation3], 128, 128, 8
    $region5: #{tpu_custom_call.1} parent=1 // pred_fallthru
      _
    // Predicated region
    $region6: #{tpu_custom_call.1} parent=1 // pred_check
      _
    $region7: #{tpu_custom_call.1} parent=1 // pred_check_branch
      %21 = sbr.rel (0) target = $region9
    $region8: #{tpu_custom_call.1} parent=1 // pred_region
      %22 = dma.done [#allocation3], 256
    $region9: #{tpu_custom_call.1} parent=1 // pred_fallthru
      _
    %v23 = vld [vmem:[#allocation2] sm:$0xff]
    %v24 = vld [vmem:[#allocation2 + $0x8] sm:$0xff]
    %vm25 = vcmask 130048
    %v26 = vsel %vm25, %v23, -inf
    %27 = vmax.xlane.f32.xlu0 %v26
    %v28 = vpop.xlane.xlu0 %27
    %v29 = vsel %vm25, %v24, -inf
    %30 = vmax.xlane.f32.xlu0 %v29
    %v31 = vpop.xlane.xlu0 %30
    %vm32 = vcmask 64512
    %v33 = vsel %vm32, %v23, -inf
    %34 = vmax.xlane.f32.xlu0 %v33
    %v35 = vpop.xlane.xlu0 %34
    %v36 = vsel %vm32, %v24, -inf
    %37 = vmax.xlane.f32.xlu0 %v36
    %v38 = vpop.xlane.xlu0 %37
    %vm39 = vcmask 130112
    %v40 = vsel %vm39, %v23, -inf
    %41 = vmax.xlane.f32.xlu0 %v40
    %v42 = vpop.xlane.xlu0 %41
    %v43 = vsel %vm39, %v24, -inf
    %44 = vmax.xlane.f32.xlu0 %v43
    %v45 = vpop.xlane.xlu0 %44
    %vm46 = vcmask 39936
    %v47 = vsel %vm46, %v23, -inf
    %48 = vmax.xlane.f32.xlu0 %v47
    %v49 = vpop.xlane.xlu0 %48
    %v50 = vsel %vm46, %v24, -inf
    %51 = vmax.xlane.f32.xlu0 %v50
    %v52 = vpop.xlane.xlu0 %51
    %vm53 = vcmask 89128
    %v54 = vsel %vm53, %v23, -inf
    %55 = vmax.xlane.f32.xlu0 %v54
    %v56 = vpop.xlane.xlu0 %55
    %v57 = vsel %vm53, %v24, -inf
    %58 = vmax.xlane.f32.xlu0 %v57
    %v59 = vpop.xlane.xlu0 %58
    %vm60 = vcmask 130136
    %v61 = vsel %vm60, %v23, -inf
    %62 = vmax.xlane.f32.xlu0 %v61
    %v63 = vpop.xlane.xlu0 %62
    %v64 = vsel %vm60, %v24, -inf
    %65 = vmax.xlane.f32.xlu0 %v64
    %v66 = vpop.xlane.xlu0 %65
    %vm67 = vcmask 261248
    %v68 = vsel %vm67, %v23, -inf
    %69 = vmax.xlane.f32.xlu0 %v68
    %v70 = vpop.xlane.xlu0 %69
    %v71 = vsel %vm67, %v24, -inf
    %72 = vmax.xlane.f32.xlu0 %v71
    %v73 = vpop.xlane.xlu0 %72
    %vm74 = vcmask 195712
    %v75 = vsel %vm74, %v23, -inf
    %76 = vmax.xlane.f32.xlu0 %v75
    %v77 = vpop.xlane.xlu0 %76
    %v78 = vsel %vm74, %v24, -inf
    %79 = vmax.xlane.f32.xlu0 %v78
    %v80 = vpop.xlane.xlu0 %79
    %vm81 = vcmask 261312
    %v82 = vsel %vm81, %v23, -inf
    %83 = vmax.xlane.f32.xlu0 %v82
    %v84 = vpop.xlane.xlu0 %83
    %v85 = vsel %vm81, %v24, -inf
    %86 = vmax.xlane.f32.xlu0 %v85
    %v87 = vpop.xlane.xlu0 %86
    %vm88 = vcmask 171136
    %v89 = vsel %vm88, %v23, -inf
    %90 = vmax.xlane.f32.xlu0 %v89
    %v91 = vpop.xlane.xlu0 %90
    %v92 = vsel %vm88, %v24, -inf
    %93 = vmax.xlane.f32.xlu0 %v92
    %v94 = vpop.xlane.xlu0 %93
    %vm95 = vcmask 220328
    %v96 = vsel %vm95, %v23, -inf
    %97 = vmax.xlane.f32.xlu0 %v96
    %v98 = vpop.xlane.xlu0 %97
    %v99 = vsel %vm95, %v24, -inf
    %100 = vmax.xlane.f32.xlu0 %v99
    %v101 = vpop.xlane.xlu0 %100
    %vm102 = vcmask 261336
    %v103 = vsel %vm102, %v23, -inf
    %104 = vmax.xlane.f32.xlu0 %v103
    %v105 = vpop.xlane.xlu0 %104
    %v106 = vsel %vm102, %v24, -inf
    %107 = vmax.xlane.f32.xlu0 %v106
    %v108 = vpop.xlane.xlu0 %107
    %vm109 = vcmask 392448
    %v110 = vsel %vm109, %v23, -inf
    %111 = vmax.xlane.f32.xlu0 %v110
    %v112 = vpop.xlane.xlu0 %111
    %v113 = vsel %vm109, %v24, -inf
    %114 = vmax.xlane.f32.xlu0 %v113
    %v115 = vpop.xlane.xlu0 %114
    %vm116 = vcmask 326912
    %v117 = vsel %vm116, %v23, -inf
    %118 = vmax.xlane.f32.xlu0 %v117
    %v119 = vpop.xlane.xlu0 %118
    %v120 = vsel %vm116, %v24, -inf
    %121 = vmax.xlane.f32.xlu0 %v120
    %v122 = vpop.xlane.xlu0 %121
    %vm123 = vcmask 392512
    %v124 = vsel %vm123, %v23, -inf
    %125 = vmax.xlane.f32.xlu0 %v124
    %v126 = vpop.xlane.xlu0 %125
    %v127 = vsel %vm123, %v24, -inf
    %128 = vmax.xlane.f32.xlu0 %v127
    %v129 = vpop.xlane.xlu0 %128
    %vm130 = vcmask 302336
    %v131 = vsel %vm130, %v23, -inf
    %132 = vmax.xlane.f32.xlu0 %v131
    %v133 = vpop.xlane.xlu0 %132
    %v134 = vsel %vm130, %v24, -inf
    %135 = vmax.xlane.f32.xlu0 %v134
    %v136 = vpop.xlane.xlu0 %135
    %vm137 = vcmask 351528
    %v138 = vsel %vm137, %v23, -inf
    %139 = vmax.xlane.f32.xlu0 %v138
    %v140 = vpop.xlane.xlu0 %139
    %v141 = vsel %vm137, %v24, -inf
    %142 = vmax.xlane.f32.xlu0 %v141
    %v143 = vpop.xlane.xlu0 %142
    %vm144 = vcmask 392536
    %v145 = vsel %vm144, %v23, -inf
    %146 = vmax.xlane.f32.xlu0 %v145
    %v147 = vpop.xlane.xlu0 %146
    %v148 = vsel %vm144, %v24, -inf
    %149 = vmax.xlane.f32.xlu0 %v148
    %v150 = vpop.xlane.xlu0 %149
    %vm151 = vcmask 523648
    %v152 = vsel %vm151, %v23, -inf
    %153 = vmax.xlane.f32.xlu0 %v152
    %v154 = vpop.xlane.xlu0 %153
    %v155 = vsel %vm151, %v24, -inf
    %156 = vmax.xlane.f32.xlu0 %v155
    %v157 = vpop.xlane.xlu0 %156
    %vm158 = vcmask 458112
    %v159 = vsel %vm158, %v23, -inf
    %160 = vmax.xlane.f32.xlu0 %v159
    %v161 = vpop.xlane.xlu0 %160
    %v162 = vsel %vm158, %v24, -inf
    %163 = vmax.xlane.f32.xlu0 %v162
    %v164 = vpop.xlane.xlu0 %163
    %vm165 = vcmask 523712
    %v166 = vsel %vm165, %v23, -inf
    %167 = vmax.xlane.f32.xlu0 %v166
    %v168 = vpop.xlane.xlu0 %167
    %v169 = vsel %vm165, %v24, -inf
    %170 = vmax.xlane.f32.xlu0 %v169
    %v171 = vpop.xlane.xlu0 %170
    %vm172 = vcmask 433536
    %v173 = vsel %vm172, %v23, -inf
    %174 = vmax.xlane.f32.xlu0 %v173
    %v175 = vpop.xlane.xlu0 %174
    %v176 = vsel %vm172, %v24, -inf
    %177 = vmax.xlane.f32.xlu0 %v176
    %v178 = vpop.xlane.xlu0 %177
    %vm179 = vcmask 482728
    %v180 = vsel %vm179, %v23, -inf
    %181 = vmax.xlane.f32.xlu0 %v180
    %v182 = vpop.xlane.xlu0 %181
    %v183 = vsel %vm179, %v24, -inf
    %184 = vmax.xlane.f32.xlu0 %v183
    %v185 = vpop.xlane.xlu0 %184
    %vm186 = vcmask 523736
    %v187 = vsel %vm186, %v23, -inf
    %188 = vmax.xlane.f32.xlu0 %v187
    %v189 = vpop.xlane.xlu0 %188
    %v190 = vsel %vm186, %v24, -inf
    %191 = vmax.xlane.f32.xlu0 %v190
    %v192 = vpop.xlane.xlu0 %191
    %vm193 = vcmask 654848
    %v194 = vsel %vm193, %v23, -inf
    %195 = vmax.xlane.f32.xlu0 %v194
    %v196 = vpop.xlane.xlu0 %195
    %v197 = vsel %vm193, %v24, -inf
    %198 = vmax.xlane.f32.xlu0 %v197
    %v199 = vpop.xlane.xlu0 %198
    %vm200 = vcmask 589312
    %v201 = vsel %vm200, %v23, -inf
    %202 = vmax.xlane.f32.xlu0 %v201
    %v203 = vpop.xlane.xlu0 %202
    %v204 = vsel %vm200, %v24, -inf
    %205 = vmax.xlane.f32.xlu0 %v204
    %v206 = vpop.xlane.xlu0 %205
    %vm207 = vcmask 654912
    %v208 = vsel %vm207, %v23, -inf
    %209 = vmax.xlane.f32.xlu0 %v208
    %v210 = vpop.xlane.xlu0 %209
    %v211 = vsel %vm207, %v24, -inf
    %212 = vmax.xlane.f32.xlu0 %v211
    %v213 = vpop.xlane.xlu0 %212
    %vm214 = vcmask 564736
    %v215 = vsel %vm214, %v23, -inf
    %216 = vmax.xlane.f32.xlu0 %v215
    %v217 = vpop.xlane.xlu0 %216
    %v218 = vsel %vm214, %v24, -inf
    %219 = vmax.xlane.f32.xlu0 %v218
    %v220 = vpop.xlane.xlu0 %219
    %vm221 = vcmask 613928
    %v222 = vsel %vm221, %v23, -inf
    %223 = vmax.xlane.f32.xlu0 %v222
    %v224 = vpop.xlane.xlu0 %223
    %v225 = vsel %vm221, %v24, -inf
    %226 = vmax.xlane.f32.xlu0 %v225
    %v227 = vpop.xlane.xlu0 %226
    %vm228 = vcmask 654936
    %v229 = vsel %vm228, %v23, -inf
    %230 = vmax.xlane.f32.xlu0 %v229
    %v231 = vpop.xlane.xlu0 %230
    %v232 = vsel %vm228, %v24, -inf
    %233 = vmax.xlane.f32.xlu0 %v232
    %v234 = vpop.xlane.xlu0 %233
    %vm235 = vcmask 786048
    %v236 = vsel %vm235, %v23, -inf
    %237 = vmax.xlane.f32.xlu0 %v236
    %v238 = vpop.xlane.xlu0 %237
    %v239 = vsel %vm235, %v24, -inf
    %240 = vmax.xlane.f32.xlu0 %v239
    %v241 = vpop.xlane.xlu0 %240
    %vm242 = vcmask 720512
    %v243 = vsel %vm242, %v23, -inf
    %244 = vmax.xlane.f32.xlu0 %v243
    %v245 = vpop.xlane.xlu0 %244
    %v246 = vsel %vm242, %v24, -inf
    %247 = vmax.xlane.f32.xlu0 %v246
    %v248 = vpop.xlane.xlu0 %247
    %vm249 = vcmask 786112
    %v250 = vsel %vm249, %v23, -inf
    %251 = vmax.xlane.f32.xlu0 %v250
    %v252 = vpop.xlane.xlu0 %251
    %v253 = vsel %vm249, %v24, -inf
    %254 = vmax.xlane.f32.xlu0 %v253
    %v255 = vpop.xlane.xlu0 %254
    %vm256 = vcmask 695936
    %v257 = vsel %vm256, %v23, -inf
    %258 = vmax.xlane.f32.xlu0 %v257
    %v259 = vpop.xlane.xlu0 %258
    %v260 = vsel %vm256, %v24, -inf
    %261 = vmax.xlane.f32.xlu0 %v260
    %v262 = vpop.xlane.xlu0 %261
    %vm263 = vcmask 745128
    %v264 = vsel %vm263, %v23, -inf
    %265 = vmax.xlane.f32.xlu0 %v264
    %v266 = vpop.xlane.xlu0 %265
    %v267 = vsel %vm263, %v24, -inf
    %268 = vmax.xlane.f32.xlu0 %v267
    %v269 = vpop.xlane.xlu0 %268
    %vm270 = vcmask 786136
    %v271 = vsel %vm270, %v23, -inf
    %272 = vmax.xlane.f32.xlu0 %v271
    %v273 = vpop.xlane.xlu0 %272
    %v274 = vsel %vm270, %v24, -inf
    %275 = vmax.xlane.f32.xlu0 %v274
    %v276 = vpop.xlane.xlu0 %275
    %vm277 = vcmask 917248
    %v278 = vsel %vm277, %v23, -inf
    %279 = vmax.xlane.f32.xlu0 %v278
    %v280 = vpop.xlane.xlu0 %279
    %v281 = vsel %vm277, %v24, -inf
    %282 = vmax.xlane.f32.xlu0 %v281
    %v283 = vpop.xlane.xlu0 %282
    %vm284 = vcmask 851712
    %v285 = vsel %vm284, %v23, -inf
    %286 = vmax.xlane.f32.xlu0 %v285
    %v287 = vpop.xlane.xlu0 %286
    %v288 = vsel %vm284, %v24, -inf
    %289 = vmax.xlane.f32.xlu0 %v288
    %v290 = vpop.xlane.xlu0 %289
    %vm291 = vcmask 917312
    %v292 = vsel %vm291, %v23, -inf
    %293 = vmax.xlane.f32.xlu0 %v292
    %v294 = vpop.xlane.xlu0 %293
    %v295 = vsel %vm291, %v24, -inf
    %296 = vmax.xlane.f32.xlu0 %v295
    %v297 = vpop.xlane.xlu0 %296
    %vm298 = vcmask 827136
    %v299 = vsel %vm298, %v23, -inf
    %300 = vmax.xlane.f32.xlu0 %v299
    %v301 = vpop.xlane.xlu0 %300
    %v302 = vsel %vm298, %v24, -inf
    %303 = vmax.xlane.f32.xlu0 %v302
    %v304 = vpop.xlane.xlu0 %303
    %vm305 = vcmask 876328
    %v306 = vsel %vm305, %v23, -inf
    %307 = vmax.xlane.f32.xlu0 %v306
    %v308 = vpop.xlane.xlu0 %307
    %v309 = vsel %vm305, %v24, -inf
    %310 = vmax.xlane.f32.xlu0 %v309
    %v311 = vpop.xlane.xlu0 %310
    %vm312 = vcmask 917336
    %v313 = vsel %vm312, %v23, -inf
    %314 = vmax.xlane.f32.xlu0 %v313
    %v315 = vpop.xlane.xlu0 %314
    %v316 = vsel %vm312, %v24, -inf
    %317 = vmax.xlane.f32.xlu0 %v316
    %v318 = vpop.xlane.xlu0 %317
    %vm319 = vcmask 1048448
    %v320 = vsel %vm319, %v23, -inf
    %321 = vmax.xlane.f32.xlu0 %v320
    %v322 = vpop.xlane.xlu0 %321
    %v323 = vsel %vm319, %v24, -inf
    %324 = vmax.xlane.f32.xlu0 %v323
    %v325 = vpop.xlane.xlu0 %324
    %vm326 = vcmask 982912
    %v327 = vsel %vm326, %v23, -inf
    %328 = vmax.xlane.f32.xlu0 %v327
    %v329 = vpop.xlane.xlu0 %328
    %v330 = vsel %vm326, %v24, -inf
    %331 = vmax.xlane.f32.xlu0 %v330
    %v332 = vpop.xlane.xlu0 %331
    %vm333 = vcmask 1048512
    %v334 = vsel %vm333, %v23, -inf
    %335 = vmax.xlane.f32.xlu0 %v334
    %v336 = vpop.xlane.xlu0 %335
    %v337 = vsel %vm333, %v24, -inf
    %338 = vmax.xlane.f32.xlu0 %v337
    %v339 = vpop.xlane.xlu0 %338
    %vm340 = vcmask 958336
    %v341 = vsel %vm340, %v23, -inf
    %342 = vmax.xlane.f32.xlu0 %v341
    %v343 = vpop.xlane.xlu0 %342
    %v344 = vsel %vm340, %v24, -inf
    %345 = vmax.xlane.f32.xlu0 %v344
    %v346 = vpop.xlane.xlu0 %345
    %vm347 = vcmask 1007528
    %v348 = vsel %vm347, %v23, -inf
    %349 = vmax.xlane.f32.xlu0 %v348
    %v350 = vpop.xlane.xlu0 %349
    %v351 = vsel %vm347, %v24, -inf
    %352 = vmax.xlane.f32.xlu0 %v351
    %v353 = vpop.xlane.xlu0 %352
    %vm354 = vcmask 1048536
    %v355 = vsel %vm354, %v23, -inf
    %356 = vmax.xlane.f32.xlu0 %v355
    %v357 = vpop.xlane.xlu0 %356
    %v358 = vsel %vm354, %v24, -inf
    %359 = vmax.xlane.f32.xlu0 %v358
    %v360 = vpop.xlane.xlu0 %359
    %vm361 = vcmask 7168
    %v362 = vsel %vm361, %v28, %v35
    %v363 = vsel %vm361, %v31, %v38
    %vm364 = vcmask 15360
    %v365 = vsel %vm364, %v362, %v42
    %v366 = vsel %vm364, %v363, %v45
    %vm367 = vcmask 23552
    %v368 = vsel %vm367, %v365, %v49
    %v369 = vsel %vm367, %v366, %v52
    %vm370 = vcmask 31744
    %v371 = vsel %vm370, %v368, %v56
    %v372 = vsel %vm370, %v369, %v59
    %v373 = vsel %vm46, %v371, %v63
    %v374 = vsel %vm46, %v372, %v66
    %vm375 = vcmask 48128
    %v376 = vsel %vm375, %v373, %v70
    %v377 = vsel %vm375, %v374, %v73
    %vm378 = vcmask 56320
    %v379 = vsel %vm378, %v376, %v77
    %v380 = vsel %vm378, %v377, %v80
    %v381 = vsel %vm32, %v379, %v84
    %v382 = vsel %vm32, %v380, %v87
    %vm383 = vcmask 72704
    %v384 = vsel %vm383, %v381, %v91
    %v385 = vsel %vm383, %v382, %v94
    %vm386 = vcmask 80896
    %v387 = vsel %vm386, %v384, %v98
    %v388 = vsel %vm386, %v385, %v101
    %vm389 = vcmask 89088
    %v390 = vsel %vm389, %v387, %v105
    %v391 = vsel %vm389, %v388, %v108
    %vm392 = vcmask 97280
    %v393 = vsel %vm392, %v390, %v112
    %v394 = vsel %vm392, %v391, %v115
    %vm395 = vcmask 105472
    %v396 = vsel %vm395, %v393, %v119
    %v397 = vsel %vm395, %v394, %v122
    %vm398 = vcmask 113664
    %v399 = vsel %vm398, %v396, %v126
    %v400 = vsel %vm398, %v397, %v129
    %vm401 = vcmask 121856
    %v402 = vsel %vm401, %v399, %v133
    %v403 = vsel %vm401, %v400, %v136
    %v404 = vsel %vm361, %v140, %v147
    %v405 = vsel %vm361, %v143, %v150
    %v406 = vsel %vm364, %v404, %v154
    %v407 = vsel %vm364, %v405, %v157
    %v408 = vsel %vm367, %v406, %v161
    %v409 = vsel %vm367, %v407, %v164
    %v410 = vsel %vm370, %v408, %v168
    %v411 = vsel %vm370, %v409, %v171
    %v412 = vsel %vm46, %v410, %v175
    %v413 = vsel %vm46, %v411, %v178
    %v414 = vsel %vm375, %v412, %v182
    %v415 = vsel %vm375, %v413, %v185
    %v416 = vsel %vm378, %v414, %v189
    %v417 = vsel %vm378, %v415, %v192
    %v418 = vsel %vm32, %v416, %v196
    %v419 = vsel %vm32, %v417, %v199
    %v420 = vsel %vm383, %v418, %v203
    %v421 = vsel %vm383, %v419, %v206
    %v422 = vsel %vm386, %v420, %v210
    %v423 = vsel %vm386, %v421, %v213
    %v424 = vsel %vm389, %v422, %v217
    %v425 = vsel %vm389, %v423, %v220
    %v426 = vsel %vm392, %v424, %v224
    %v427 = vsel %vm392, %v425, %v227
    %v428 = vsel %vm395, %v426, %v231
    %v429 = vsel %vm395, %v427, %v234
    %v430 = vsel %vm398, %v428, %v238
    %v431 = vsel %vm398, %v429, %v241
    %v432 = vsel %vm401, %v430, %v245
    %v433 = vsel %vm401, %v431, %v248
    %v434 = vsel %vm361, %v252, %v259
    %v435 = vsel %vm361, %v255, %v262
    %v436 = vsel %vm364, %v434, %v266
    %v437 = vsel %vm364, %v435, %v269
    %v438 = vsel %vm367, %v436, %v273
    %v439 = vsel %vm367, %v437, %v276
    %v440 = vsel %vm370, %v438, %v280
    %v441 = vsel %vm370, %v439, %v283
    %v442 = vsel %vm46, %v440, %v287
    %v443 = vsel %vm46, %v441, %v290
    %v444 = vsel %vm375, %v442, %v294
    %v445 = vsel %vm375, %v443, %v297
    %v446 = vsel %vm378, %v444, %v301
    %v447 = vsel %vm378, %v445, %v304
    %v448 = vsel %vm32, %v446, %v308
    %v449 = vsel %vm32, %v447, %v311
    %v450 = vsel %vm383, %v448, %v315
    %v451 = vsel %vm383, %v449, %v318
    %v452 = vsel %vm386, %v450, %v322
    %v453 = vsel %vm386, %v451, %v325
    %v454 = vsel %vm389, %v452, %v329
    %v455 = vsel %vm389, %v453, %v332
    %v456 = vsel %vm392, %v454, %v336
    %v457 = vsel %vm392, %v455, %v339
    %v458 = vsel %vm395, %v456, %v343
    %v459 = vsel %vm395, %v457, %v346
    %v460 = vsel %vm398, %v458, %v350
    %v461 = vsel %vm398, %v459, %v353
    %v462 = vsel %vm401, %v460, %v357
    %v463 = vsel %vm401, %v461, %v360
    %466 = vrot.lane.b32.xlu0 %v432, 16
    %v467 = vpop.permute.xlu0 %466
    %468 = vrot.lane.b32.xlu0 %v433, 16
    %v469 = vpop.permute.xlu0 %468
    %474 = vrot.lane.b32.xlu0 %v462, 32
    %v475 = vpop.permute.xlu0 %474
    %476 = vrot.lane.b32.xlu0 %v463, 32
    %v477 = vpop.permute.xlu0 %476
    %v480 = vsel %vm25, %v402, %v467
    %v481 = vsel %vm25, %v403, %v469
    %vm482 = vcmask 261120
    %v483 = vsel %vm482, %v480, %v475
    %v484 = vsel %vm482, %v481, %v477
    %vm485 = vcmask 392192
    %486 = vst.msk [vmem:[#allocation5] sm:$0xff] %vm485, %v483
    %487 = vst.msk [vmem:[#allocation5 + $0x8] sm:$0xff] %vm485, %v484
    // Predicated region
    $region10: #{tpu_custom_call.1} parent=1 // pred_check
      _
    $region11: #{tpu_custom_call.1} parent=1 // pred_check_branch
      %489 = sbr.rel (0) target = $region13
    $region12: #{tpu_custom_call.1} parent=1 // pred_region
      %s491 = ssub.s32 256, 256
      %492 = vsyncadd [#allocation4], %s491
      %s493 = sshll.u32 [#allocation5], 4
      %s494 = int_to_ptr.vmem [resolvable:$true] %s493
      %499 = dma.vmem_to_hbm [thread:$0]  %s494, 256, %s1, [#allocation4], 128, 128, 8
    $region13: #{tpu_custom_call.1} parent=1 // pred_fallthru
      _
    // Predicated region
    $region14: #{tpu_custom_call.1} parent=1 // pred_check
      _
    $region15: #{tpu_custom_call.1} parent=1 // pred_check_branch
      %501 = sbr.rel (0) target = $region17
    $region16: #{tpu_custom_call.1} parent=1 // pred_region
      %502 = dma.done [#allocation4], 256
    $region17: #{tpu_custom_call.1} parent=1 // pred_fallthru
      _
    %503 = vsyncpa [#allocation3], 1
    %504 = vsyncpa [#allocation4], 1

</llo_original>
